<compile_context>
chip_gen: v5e
topology: v5e:2x2
jax: 0.10.0
libtpu: 0.0.40
codegen_flags: <defaults>
</compile_context>

<pallas_src>
import functools

import jax
import jax.numpy as jnp
from jax.experimental import pallas as pl
from jax.experimental.pallas import tpu as pltpu


def _inequality_kernel(x_ref, out_ref, density_ref, *, threshold, mode):
    # x_ref: (TB, C, 1, HW) VMEM tile. Reduce |x| over axis=1 (channels).
    x = x_ref[...].astype(jnp.float32)              # upcast once (bf16-safe)
    density = jnp.sum(jnp.abs(x), axis=1)           # (TB, 1, HW): C-1 VPU adds
    shift = density - threshold
    if mode == 'leq':
        act = jnp.maximum(shift, 0.0)               # ReLU(shift)
    else:
        act = jnp.maximum(-shift, 0.0)              # ReLU(-shift)
    out_ref[...] = act.astype(out_ref.dtype)
    density_ref[...] = density.astype(density_ref.dtype)


def inequality_func(x, threshold, mode='leq'):
    """Pallas TPU implementation of InequalityFunc.forward.

    Args:
      x: (B, C, H, W) float array (NCHW, matching PyTorch).
      threshold: python float (static).
      mode: 'leq' or anything else ('geq' behaviour), static.

    Returns:
      (relu_out, density), both of shape (B, H, W), dtype of x.
    """
    B, C, H, W = x.shape
    HW = H * W
    # Lane-dense, reduction-friendly layout: (B, C, 1, HW). Free reshape.
    x4 = x.reshape(B, C, 1, HW)

    # Batch-tile sizing: keep double-buffered input + both outputs well under
    # the v7x default scoped VMEM limit (32 MiB of 64 MiB physical).
    itemsize = jnp.dtype(x.dtype).itemsize
    budget_bytes = 16 * 1024 * 1024
    per_batch_bytes = 2 * (C * HW * itemsize + 2 * HW * itemsize)  # 2x = dbl-buffer
    tb_cap = max(1, budget_bytes // max(per_batch_bytes, 1))
    TB = int(min(B, tb_cap))
    num_blocks = (B + TB - 1) // TB

    kernel = functools.partial(_inequality_kernel,
                               threshold=float(threshold), mode=mode)

    out_shapes = (
        jax.ShapeDtypeStruct((B, 1, HW), x.dtype),  # relu(shift)
        jax.ShapeDtypeStruct((B, 1, HW), x.dtype),  # density
    )

    # Only shard across TensorCores (v7x) when there are multiple real tiles.
    semantics = ("parallel",) if num_blocks > 1 else ("arbitrary",)

    act, density = pl.pallas_call(
        kernel,
        out_shape=out_shapes,
        grid=(num_blocks,),
        in_specs=[
            pl.BlockSpec((TB, C, 1, HW), lambda b: (b, 0, 0, 0)),
        ],
        out_specs=(
            pl.BlockSpec((TB, 1, HW), lambda b: (b, 0, 0)),
            pl.BlockSpec((TB, 1, HW), lambda b: (b, 0, 0)),
        ),
        compiler_params=pltpu.CompilerParams(dimension_semantics=semantics),
    )(x4)

    return act.reshape(B, H, W), density.reshape(B, H, W)


def _reference(x, threshold, mode='leq'):
    density = jnp.sum(jnp.abs(x.astype(jnp.float32)), axis=1)
    shift = density - threshold
    act = jnp.maximum(shift if mode == 'leq' else -shift, 0.0)
    return act.astype(x.dtype), density.astype(x.dtype)


if __name__ == "__main__":
    key = jax.random.PRNGKey(0)
    B, C, H, W = 2, 4, 16, 16
    x = jax.random.normal(key, (B, C, H, W), dtype=jnp.float32)

    threshold = 2.5

    ok = True
    for mode in ('leq', 'geq'):
        out, density = inequality_func(x, threshold, mode=mode)
        jax.block_until_ready((out, density))
        ref_out, ref_density = _reference(x, threshold, mode=mode)
        ok &= bool(jnp.allclose(out, ref_out, atol=1e-5, rtol=1e-5))
        ok &= bool(jnp.allclose(density, ref_density, atol=1e-5, rtol=1e-5))

    assert ok, "mismatch vs reference"
    print("KERNEL_OK")
</pallas_src>

<mosaic_0001>
module attributes {stable_mosaic.version = 11 : i64} {
  func.func @_inequality_kernel(%arg0: i32, %arg1: memref<2x4x1x256xf32, #tpu.memory_space<vmem>>, %arg2: memref<2x1x256xf32, #tpu.memory_space<vmem>>, %arg3: memref<2x1x256xf32, #tpu.memory_space<vmem>>) attributes {dimension_semantics = [#tpu.dimension_semantics<arbitrary>], iteration_bounds = array<i64: 1>, scalar_prefetch = 0 : i64, scratch_operands = 0 : i64, tpu.core_type = #tpu.core_type<tc>, window_params = [{transform_indices = @transform_0, window_bounds = array<i64: 2, 4, 1, 256>}, {transform_indices = @transform_1, window_bounds = array<i64: 2, 1, 256>}, {transform_indices = @transform_2, window_bounds = array<i64: 2, 1, 256>}]} {
    %c0 = arith.constant 0 : index
    %c0_0 = arith.constant 0 : index
    %c0_1 = arith.constant 0 : index
    %c0_2 = arith.constant 0 : index
    %0 = vector.load %arg1[%c0, %c0_0, %c0_1, %c0_2] : memref<2x4x1x256xf32, #tpu.memory_space<vmem>>, vector<2x4x1x256xf32>
    %1 = math.absf %0 : vector<2x4x1x256xf32>
    %cst = arith.constant dense<0.000000e+00> : vector<2x1x256xf32>
    %2 = vector.multi_reduction <add>, %1, %cst [1] : vector<2x4x1x256xf32> to vector<2x1x256xf32>
    %cst_3 = arith.constant 2.500000e+00 : f32
    %3 = vector.broadcast %cst_3 : f32 to vector<2x1x256xf32>
    %4 = arith.subf %2, %3 : vector<2x1x256xf32>
    %cst_4 = arith.constant 0.000000e+00 : f32
    %5 = vector.broadcast %cst_4 : f32 to vector<2x1x256xf32>
    %6 = arith.maximumf %4, %5 : vector<2x1x256xf32>
    %c0_5 = arith.constant 0 : index
    %c0_6 = arith.constant 0 : index
    %c0_7 = arith.constant 0 : index
    %7 = vector.load %arg2[%c0_5, %c0_6, %c0_7] : memref<2x1x256xf32, #tpu.memory_space<vmem>>, vector<2x1x256xf32>
    tpu.vector_store %arg2[%c0_5, %c0_6, %c0_7], %6 {strides = array<i32>} : memref<2x1x256xf32, #tpu.memory_space<vmem>>, vector<2x1x256xf32>,
    %c0_8 = arith.constant 0 : index
    %c0_9 = arith.constant 0 : index
    %c0_10 = arith.constant 0 : index
    %8 = vector.load %arg3[%c0_8, %c0_9, %c0_10] : memref<2x1x256xf32, #tpu.memory_space<vmem>>, vector<2x1x256xf32>
    tpu.vector_store %arg3[%c0_8, %c0_9, %c0_10], %2 {strides = array<i32>} : memref<2x1x256xf32, #tpu.memory_space<vmem>>, vector<2x1x256xf32>,
    return
  }
  func.func @transform_0(%arg0: i32) -> (i32, i32, i32, i32) {
    %c0_i32 = arith.constant 0 : i32
    %c0_i32_0 = arith.constant 0 : i32
    %c0_i32_1 = arith.constant 0 : i32
    %c0_i32_2 = arith.constant 0 : i32
    return %arg0, %c0_i32, %c0_i32_0, %c0_i32_1 : i32, i32, i32, i32
  }
  func.func @transform_1(%arg0: i32) -> (i32, i32, i32) {
    %c0_i32 = arith.constant 0 : i32
    %c0_i32_0 = arith.constant 0 : i32
    %c0_i32_1 = arith.constant 0 : i32
    return %arg0, %c0_i32, %c0_i32_0 : i32, i32, i32
  }
  func.func @transform_2(%arg0: i32) -> (i32, i32, i32) {
    %c0_i32 = arith.constant 0 : i32
    %c0_i32_0 = arith.constant 0 : i32
    %c0_i32_1 = arith.constant 0 : i32
    return %arg0, %c0_i32, %c0_i32_0 : i32, i32, i32
  }
}

</mosaic_0001>

<llo_original>
// kernel: tpu_custom_call.1
$region0: #{tpu_custom_call.1}
  #allocation0 [shape = 'u32[]', space=smem, size = 0x4, offset = 0x4, fixed_abs, tag = 'smem constant byte address 0x4 - core index']
  #allocation1 [shape = 'u32[72,128]{1,0:T(1,128)}', space=vmem, size = 0x9000, scoped, tag = 'internal scratch']
  %s0 = inlined_call_operand.hbm [shape: f32[2,4,1,256], index: 0, kind: input, shape index: {}]
  %s1 = inlined_call_operand.hbm [shape: f32[2,1,256], index: 1, kind: output, shape index: {0}]
  %s2 = inlined_call_operand.hbm [shape: f32[2,1,256], index: 2, kind: output, shape index: {1}]
  %3 = xla_tuple %s1, %s2
  %s4 = sld [smem:[#allocation0]]
  $region26: #{tpu_custom_call.1} parent=0
    _
  %s6 = ssub.s32 1, %s4
  %s7 = scalar_select 0, %s6, %s4
  $region1: #{tpu_custom_call.1} parent=0
    #allocation2 [shape = 'u8[8192]{0}', space=vmem, size = 0x2000, scoped, tag = 'input window, operand 0, single buffered']
    #allocation3 [shape = 's32[1]{0}', space=sflag, size = 0x4, scoped, tag = 'scoped memory for tpu_custom_call.1']
    #allocation4 [shape = 's32[1]{0}', space=sflag, size = 0x4, scoped, tag = 'scoped memory for tpu_custom_call.1']
    #allocation5 [shape = 'u8[2048]{0}', space=vmem, size = 0x800, scoped, tag = 'output window, operand 0, single buffered']
    #allocation6 [shape = 'u8[2048]{0}', space=vmem, size = 0x800, scoped, tag = 'output window, operand 1, single buffered']
    #allocation7 [shape = 's32[1]{0}', space=sflag, size = 0x4, scoped, tag = 'scoped memory for tpu_custom_call.1']
    %8 = vsyncpa [#allocation3], 0
    %9 = vsyncpa [#allocation4], 0
    %10 = vsyncpa [#allocation7], 0
    // Predicated region
    $region2: #{tpu_custom_call.1} parent=1 // pred_check
      _
    $region3: #{tpu_custom_call.1} parent=1 // pred_check_branch
      %12 = sbr.rel (0) target = $region5
    $region4: #{tpu_custom_call.1} parent=1 // pred_region
      %14 = vsyncadd [#allocation3], 0
      %s15 = sshll.u32 %s0, 4
      %s16 = int_to_ptr.hbm [resolvable:$true] %s15
      %s17 = sshll.u32 [#allocation2], 4
      %s18 = int_to_ptr.vmem [resolvable:$true] %s17
      %23 = dma.hbm_to_vmem [thread:$0]  %s16, 256, %s18, [#allocation3], 32, 32, 2
    $region5: #{tpu_custom_call.1} parent=1 // pred_fallthru
      _
    // Predicated region
    $region6: #{tpu_custom_call.1} parent=1 // pred_check
      _
    $region7: #{tpu_custom_call.1} parent=1 // pred_check_branch
      %25 = sbr.rel (0) target = $region9
    $region8: #{tpu_custom_call.1} parent=1 // pred_region
      %27 = dma.done [#allocation3], 256
    $region9: #{tpu_custom_call.1} parent=1 // pred_fallthru
      _
    %v28 = vld [vmem:[#allocation2] sm:$0x3]
    %v29 = vld [vmem:[#allocation2 + $0x2] sm:$0x3]
    %v30 = vld [vmem:[#allocation2 + $0x4] sm:$0x3]
    %v31 = vld [vmem:[#allocation2 + $0x6] sm:$0x3]
    %v32 = vld [vmem:[#allocation2 + $0x8] sm:$0x3]
    %v33 = vld [vmem:[#allocation2 + $0xa] sm:$0x3]
    %v34 = vld [vmem:[#allocation2 + $0xc] sm:$0x3]
    %v35 = vld [vmem:[#allocation2 + $0xe] sm:$0x3]
    %v36 = vand.u32 2147483647, %v28
    %v37 = vand.u32 2147483647, %v29
    %v38 = vand.u32 2147483647, %v30
    %v39 = vand.u32 2147483647, %v31
    %v40 = vand.u32 2147483647, %v32
    %v41 = vand.u32 2147483647, %v33
    %v42 = vand.u32 2147483647, %v34
    %v43 = vand.u32 2147483647, %v35
    %v52 = vperm.slane %v36, 0
    %v53 = vperm.slane %v36, 1
    %v54 = vperm.slane %v37, 0
    %v55 = vperm.slane %v37, 1
    %v56 = vperm.slane %v38, 0
    %v57 = vperm.slane %v38, 1
    %v58 = vperm.slane %v39, 0
    %v59 = vperm.slane %v39, 1
    %v60 = vperm.slane %v40, 0
    %v61 = vperm.slane %v40, 1
    %v62 = vperm.slane %v41, 0
    %v63 = vperm.slane %v41, 1
    %v64 = vperm.slane %v42, 0
    %v65 = vperm.slane %v42, 1
    %v66 = vperm.slane %v43, 0
    %v67 = vperm.slane %v43, 1
    %vm84 = vcmask 1040384
    %v85 = vsel %vm84, %v52, 0.0
    %v86 = vsel %vm84, %v54, 0.0
    %v87 = vadd.f32 %v85, %v86
    %v88 = vsel %vm84, %v56, 0.0
    %v89 = vadd.f32 %v87, %v88
    %v90 = vsel %vm84, %v58, 0.0
    %v91 = vadd.f32 %v89, %v90
    %v92 = vsel %vm84, %v53, 0.0
    %v93 = vsel %vm84, %v55, 0.0
    %v94 = vadd.f32 %v92, %v93
    %v95 = vsel %vm84, %v57, 0.0
    %v96 = vadd.f32 %v94, %v95
    %v97 = vsel %vm84, %v59, 0.0
    %v98 = vadd.f32 %v96, %v97
    %v99 = vsel %vm84, %v60, 0.0
    %v100 = vsel %vm84, %v62, 0.0
    %v101 = vadd.f32 %v99, %v100
    %v102 = vsel %vm84, %v64, 0.0
    %v103 = vadd.f32 %v101, %v102
    %v104 = vsel %vm84, %v66, 0.0
    %v105 = vadd.f32 %v103, %v104
    %v106 = vsel %vm84, %v61, 0.0
    %v107 = vsel %vm84, %v63, 0.0
    %v108 = vadd.f32 %v106, %v107
    %v109 = vsel %vm84, %v65, 0.0
    %v110 = vadd.f32 %v108, %v109
    %v111 = vsel %vm84, %v67, 0.0
    %v112 = vadd.f32 %v110, %v111
    %v113 = vsub.f32 %v91, 2.5
    %v114 = vsub.f32 %v98, 2.5
    %v115 = vsub.f32 %v105, 2.5
    %v116 = vsub.f32 %v112, 2.5
    %v117 = vmax.f32 %v113, 0.0
    %v118 = vmax.f32 %v114, 0.0
    %v119 = vmax.f32 %v115, 0.0
    %v120 = vmax.f32 %v116, 0.0
    %v125 = vrot.slane %v118, 7
    %v126 = vrot.slane %v120, 7
    %v127 = vsel %vm84, %v117, %v125
    %v128 = vsel %vm84, %v119, %v126
    %v131 = vlaneseq
    %vm132 = vcmp.ge.s32.totalorder %v131, 0
    %vm133 = vcmp.lt.s32.totalorder %v131, 256
    %vm134 = vmand %vm132, %vm133
    %135 = vst.msk [vmem:[#allocation5] sm:$0x3] %vm134, %v127
    %136 = vst.msk [vmem:[#allocation5 + $0x2] sm:$0x3] %vm134, %v128
    %v141 = vrot.slane %v98, 7
    %v142 = vrot.slane %v112, 7
    %v143 = vsel %vm84, %v91, %v141
    %v144 = vsel %vm84, %v105, %v142
    %147 = vst.msk [vmem:[#allocation6] sm:$0x3] %vm134, %v143
    %148 = vst.msk [vmem:[#allocation6 + $0x2] sm:$0x3] %vm134, %v144
    // Predicated region
    $region10: #{tpu_custom_call.1} parent=1 // pred_check
      _
    $region11: #{tpu_custom_call.1} parent=1 // pred_check_branch
      %150 = sbr.rel (0) target = $region13
    $region12: #{tpu_custom_call.1} parent=1 // pred_region
      %152 = vsyncadd [#allocation4], 0
      %s153 = sshll.u32 [#allocation5], 4
      %s154 = int_to_ptr.vmem [resolvable:$true] %s153
      %s155 = sshll.u32 %s1, 4
      %s156 = int_to_ptr.hbm [resolvable:$true] %s155
      %161 = dma.vmem_to_hbm [thread:$0]  %s154, 64, %s156, [#allocation4], 32, 32, 2
    $region13: #{tpu_custom_call.1} parent=1 // pred_fallthru
      _
    // Predicated region
    $region14: #{tpu_custom_call.1} parent=1 // pred_check
      _
    $region15: #{tpu_custom_call.1} parent=1 // pred_check_branch
      %163 = sbr.rel (0) target = $region17
    $region16: #{tpu_custom_call.1} parent=1 // pred_region
      %165 = vsyncadd [#allocation7], 0
      %s166 = sshll.u32 [#allocation6], 4
      %s167 = int_to_ptr.vmem [resolvable:$true] %s166
      %s168 = sshll.u32 %s2, 4
      %s169 = int_to_ptr.hbm [resolvable:$true] %s168
      %174 = dma.vmem_to_hbm [thread:$0]  %s167, 64, %s169, [#allocation7], 32, 32, 2
    $region17: #{tpu_custom_call.1} parent=1 // pred_fallthru
      _
    // Predicated region
    $region18: #{tpu_custom_call.1} parent=1 // pred_check
      _
    $region19: #{tpu_custom_call.1} parent=1 // pred_check_branch
      %176 = sbr.rel (0) target = $region21
    $region20: #{tpu_custom_call.1} parent=1 // pred_region
      %178 = dma.done [#allocation4], 64
    $region21: #{tpu_custom_call.1} parent=1 // pred_fallthru
      _
    // Predicated region
    $region22: #{tpu_custom_call.1} parent=1 // pred_check
      _
    $region23: #{tpu_custom_call.1} parent=1 // pred_check_branch
      %180 = sbr.rel (0) target = $region25
    $region24: #{tpu_custom_call.1} parent=1 // pred_region
      %182 = dma.done [#allocation7], 64
    $region25: #{tpu_custom_call.1} parent=1 // pred_fallthru
      _
    %183 = vsyncpa [#allocation3], 1
    %184 = vsyncpa [#allocation4], 1
    %185 = vsyncpa [#allocation7], 1

</llo_original>
